<compile_context>
chip_gen: v7x
topology: tpu7x:2x2x1
jax: 0.10.0
libtpu: 0.0.40
codegen_flags: <defaults>
</compile_context>

<pallas_src>
import functools
from math import sqrt

import jax
import jax.numpy as jnp
from jax.experimental import pallas as pl
from jax.experimental.pallas import tpu as pltpu


def _round_up(x, m):
    return ((x + m - 1) // m) * m


def _linear_kernel(x_ref, w_ref, b_ref, o_ref, acc_ref):
    # x_ref  : (tm, tk)  activation tile
    # w_ref  : (tk, tn)  weight tile already in (in, out) layout -> plain MXU matmul
    # b_ref  : (1,  tn)  bias tile (block index constant across K -> DMA elided)
    # o_ref  : (tm, tn)  output tile
    # acc_ref: (tm, tn)  f32 accumulator scratch (VMEM), resident across the K axis
    k = pl.program_id(2)

    @pl.when(k == 0)
    def _():
        acc_ref[...] = jnp.zeros_like(acc_ref)

    acc_ref[...] += jnp.dot(
        x_ref[...], w_ref[...], preferred_element_type=jnp.float32
    )

    @pl.when(k == pl.num_programs(2) - 1)
    def _():
        o_ref[...] = (acc_ref[...] + b_ref[...].astype(jnp.float32)).astype(o_ref.dtype)


def _pick_tiles(M, N, K, tm_max, tn_max, tk_max):
    # f32: sublane alignment 8 on second-to-last dims, lane alignment 128 on last dims.
    tm = min(tm_max, _round_up(M, 8))

    # Take the whole (128-aligned) K in one step when it fits the budget.
    Kp128 = _round_up(K, 128)
    tk = Kp128 if Kp128 <= tk_max else tk_max

    # Lane-dense N tile (>=128). If the M axis is a single block (small batch),
    # prefer a tn that leaves >=2 blocks on the parallel N axis (v7x megacore).
    Np128 = _round_up(N, 128)
    tn = min(tn_max, Np128)
    m_blocks = pl.cdiv(M, tm)
    if m_blocks == 1 and Np128 >= 256:
        best = 128
        t = 128
        while t <= min(tn_max, Np128 // 2):
            if Np128 % t == 0:
                best = t
            t += 128
        tn = best
    return tm, tn, tk


@functools.partial(jax.jit, static_argnames=("tm_max", "tn_max", "tk_max"))
def my_linear(x, weight, bias, *, tm_max=256, tn_max=512, tk_max=1024):
    """y = x @ weight.T + bias, weight in PyTorch (out, in) layout."""
    M, K = x.shape
    N, Kw = weight.shape
    assert K == Kw, "in_features mismatch"
    assert bias.shape == (N,)

    tm, tn, tk = _pick_tiles(M, N, K, tm_max, tn_max, tk_max)
    Mp, Np, Kp = _round_up(M, tm), _round_up(N, tn), _round_up(K, tk)

    # One-time layout prep (outside the hot loop). Under jit, transpose + pad fuse
    # into a single copy of the weight. Zero padding is exact for matmul + bias.
    w_kn = jnp.transpose(weight)                                            # (K, N)
    xp = x if (Mp == M and Kp == K) else jnp.pad(x, ((0, Mp - M), (0, Kp - K)))
    wp = w_kn if (Np == N and Kp == K) else jnp.pad(w_kn, ((0, Kp - K), (0, Np - N)))
    bp = (bias if Np == N else jnp.pad(bias, (0, Np - N))).reshape(1, Np)

    grid = (Mp // tm, Np // tn, Kp // tk)

    itemsize = jnp.dtype(x.dtype).itemsize
    cost = pl.CostEstimate(
        flops=2 * Mp * Np * Kp,
        transcendentals=0,
        bytes_accessed=(
            Mp * Kp * itemsize * (Np // tn)      # x re-streamed once per N block
            + Kp * Np * itemsize * (Mp // tm)    # w re-streamed once per M block
            + Np * itemsize
            + Mp * Np * itemsize
        ),
    )

    out = pl.pallas_call(
        _linear_kernel,
        out_shape=jax.ShapeDtypeStruct((Mp, Np), x.dtype),
        grid_spec=pltpu.PrefetchScalarGridSpec(
            num_scalar_prefetch=0,
            grid=grid,
            in_specs=[
                pl.BlockSpec((tm, tk), lambda i, j, k: (i, k)),   # x tile
                pl.BlockSpec((tk, tn), lambda i, j, k: (k, j)),   # weight tile (in, out)
                pl.BlockSpec((1, tn), lambda i, j, k: (0, j)),    # bias tile
            ],
            out_specs=pl.BlockSpec((tm, tn), lambda i, j, k: (i, j)),
            scratch_shapes=[pltpu.VMEM((tm, tn), jnp.float32)],
        ),
        compiler_params=pltpu.CompilerParams(
            dimension_semantics=("parallel", "parallel", "arbitrary"),
        ),
        cost_estimate=cost,
    )(xp, wp, bp)

    if Mp != M or Np != N:
        out = out[:M, :N]
    return out


if __name__ == "__main__":
    key = jax.random.PRNGKey(0)

    def make_params(kw, kb, in_features, out_features):
        # Matches MyLinear.__init__ distributions:
        #   weight ~ U(-sqrt(1/in), sqrt(1/in)),  bias ~ U(-1/in, 1/in)
        k = 1.0 / in_features
        w = jax.random.uniform(
            kw, (out_features, in_features), jnp.float32,
            minval=-sqrt(k), maxval=sqrt(k))
        b = jax.random.uniform(
            kb, (out_features,), jnp.float32, minval=-k, maxval=k)
        return w, b

    # --- small shape implied by the module (exercises the padding path) ---
    in_features, out_features, batch = 32, 16, 8
    kx, kw, kb, key = jax.random.split(key, 4)
    weight, bias = make_params(kw, kb, in_features, out_features)
    x = jax.random.normal(kx, (batch, in_features), jnp.float32)

    y = jax.block_until_ready(my_linear(x, weight, bias))
    y_ref = x @ weight.T + bias
    assert y.shape == (batch, out_features)
    assert jnp.allclose(y, y_ref, atol=1e-5, rtol=1e-5)

    # --- larger shape (exercises multi-block N grid + single full-K step) ---
    in_features2, out_features2, batch2 = 1024, 384, 16
    kx2, kw2, kb2, key = jax.random.split(key, 4)
    weight2, bias2 = make_params(kw2, kb2, in_features2, out_features2)
    x2 = jax.random.normal(kx2, (batch2, in_features2), jnp.float32)

    y2 = jax.block_until_ready(my_linear(x2, weight2, bias2))
    y2_ref = x2 @ weight2.T + bias2
    assert y2.shape == (batch2, out_features2)
    assert jnp.allclose(y2, y2_ref, atol=1e-4, rtol=1e-4)

    # --- multi-K-step shape (exercises the K accumulation path) ---
    in_features3, out_features3, batch3 = 2304, 512, 64
    kx3, kw3, kb3, key = jax.random.split(key, 4)
    weight3, bias3 = make_params(kw3, kb3, in_features3, out_features3)
    x3 = jax.random.normal(kx3, (batch3, in_features3), jnp.float32)

    y3 = jax.block_until_ready(my_linear(x3, weight3, bias3))
    y3_ref = x3 @ weight3.T + bias3
    assert y3.shape == (batch3, out_features3)
    assert jnp.allclose(y3, y3_ref, atol=1e-4, rtol=1e-4)

    print("KERNEL_OK")
</pallas_src>

<mosaic_0001>
module attributes {stable_mosaic.version = 11 : i64} {
  func.func @_linear_kernel(%arg0: i32, %arg1: i32, %arg2: i32, %arg3: memref<8x128xf32, #tpu.memory_space<vmem>>, %arg4: memref<128x128xf32, #tpu.memory_space<vmem>>, %arg5: memref<1x128xf32, #tpu.memory_space<vmem>>, %arg6: memref<8x128xf32, #tpu.memory_space<vmem>>, %arg7: memref<8x128xf32, #tpu.memory_space<vmem>>) attributes {dimension_semantics = [#tpu.dimension_semantics<parallel>, #tpu.dimension_semantics<parallel>, #tpu.dimension_semantics<arbitrary>], iteration_bounds = array<i64: 1, 1, 1>, scalar_prefetch = 0 : i64, scratch_operands = 1 : i64, tpu.core_type = #tpu.core_type<tc>, window_params = [{transform_indices = @transform_0, window_bounds = array<i64: 8, 128>}, {transform_indices = @transform_1, window_bounds = array<i64: 128, 128>}, {transform_indices = @transform_2, window_bounds = array<i64: 1, 128>}, {transform_indices = @transform_3, window_bounds = array<i64: 8, 128>}]} {
    %c0_i32 = arith.constant 0 : i32
    %0 = arith.cmpi eq, %arg2, %c0_i32 : i32
    %1 = arith.extui %0 : i1 to i32
    %c0_i32_0 = arith.constant 0 : i32
    %2 = arith.cmpi ne, %1, %c0_i32_0 : i32
    scf.if %2 {
      %cst_10 = arith.constant 0.000000e+00 : f32
      %12 = vector.broadcast %cst_10 : f32 to vector<8x128xf32>
      %c0_11 = arith.constant 0 : index
      %c0_12 = arith.constant 0 : index
      %13 = vector.load %arg7[%c0_11, %c0_12] : memref<8x128xf32, #tpu.memory_space<vmem>>, vector<8x128xf32>
      tpu.vector_store %arg7[%c0_11, %c0_12], %12 {strides = array<i32>} : memref<8x128xf32, #tpu.memory_space<vmem>>, vector<8x128xf32>,
    } else {
    }
    %c0 = arith.constant 0 : index
    %c0_1 = arith.constant 0 : index
    %3 = vector.load %arg7[%c0, %c0_1] : memref<8x128xf32, #tpu.memory_space<vmem>>, vector<8x128xf32>
    %c0_2 = arith.constant 0 : index
    %c0_3 = arith.constant 0 : index
    %4 = vector.load %arg3[%c0_2, %c0_3] : memref<8x128xf32, #tpu.memory_space<vmem>>, vector<8x128xf32>
    %c0_4 = arith.constant 0 : index
    %c0_5 = arith.constant 0 : index
    %5 = vector.load %arg4[%c0_4, %c0_5] : memref<128x128xf32, #tpu.memory_space<vmem>>, vector<128x128xf32>
    %cst = arith.constant dense<0.000000e+00> : vector<8x128xf32>
    %6 = tpu.matmul %4, %5, %cst {dimension_numbers = #tpu.dot_dimension_numbers<[1], [0], [0], [1], [0, 0, 1, 1], [], []>} : vector<8x128xf32>, vector<128x128xf32>, vector<8x128xf32> -> vector<8x128xf32>
    %7 = arith.addf %3, %6 : vector<8x128xf32>
    %c0_6 = arith.constant 0 : index
    %c0_7 = arith.constant 0 : index
    %8 = vector.load %arg7[%c0_6, %c0_7] : memref<8x128xf32, #tpu.memory_space<vmem>>, vector<8x128xf32>
    tpu.vector_store %arg7[%c0_6, %c0_7], %7 {strides = array<i32>} : memref<8x128xf32, #tpu.memory_space<vmem>>, vector<8x128xf32>,
    %c0_i32_8 = arith.constant 0 : i32
    %9 = arith.cmpi eq, %arg2, %c0_i32_8 : i32
    %10 = arith.extui %9 : i1 to i32
    %c0_i32_9 = arith.constant 0 : i32
    %11 = arith.cmpi ne, %10, %c0_i32_9 : i32
    scf.if %11 {
      %c0_10 = arith.constant 0 : index
      %c0_11 = arith.constant 0 : index
      %12 = vector.load %arg7[%c0_10, %c0_11] : memref<8x128xf32, #tpu.memory_space<vmem>>, vector<8x128xf32>
      %c0_12 = arith.constant 0 : index
      %c0_13 = arith.constant 0 : index
      %13 = vector.load %arg5[%c0_12, %c0_13] : memref<1x128xf32, #tpu.memory_space<vmem>>, vector<1x128xf32>
      %14 = vector.broadcast %13 : vector<1x128xf32> to vector<8x128xf32>
      %15 = arith.addf %12, %14 : vector<8x128xf32>
      %c0_14 = arith.constant 0 : index
      %c0_15 = arith.constant 0 : index
      %16 = vector.load %arg6[%c0_14, %c0_15] : memref<8x128xf32, #tpu.memory_space<vmem>>, vector<8x128xf32>
      tpu.vector_store %arg6[%c0_14, %c0_15], %15 {strides = array<i32>} : memref<8x128xf32, #tpu.memory_space<vmem>>, vector<8x128xf32>,
    } else {
    }
    return
  }
  func.func @transform_0(%arg0: i32, %arg1: i32, %arg2: i32) -> (i32, i32) {
    %c0_i32 = arith.constant 0 : i32
    return %arg0, %arg2 : i32, i32
  }
  func.func @transform_1(%arg0: i32, %arg1: i32, %arg2: i32) -> (i32, i32) {
    %c0_i32 = arith.constant 0 : i32
    return %arg2, %arg1 : i32, i32
  }
  func.func @transform_2(%arg0: i32, %arg1: i32, %arg2: i32) -> (i32, i32) {
    %c0_i32 = arith.constant 0 : i32
    %c0_i32_0 = arith.constant 0 : i32
    return %c0_i32, %arg1 : i32, i32
  }
  func.func @transform_3(%arg0: i32, %arg1: i32, %arg2: i32) -> (i32, i32) {
    %c0_i32 = arith.constant 0 : i32
    return %arg0, %arg1 : i32, i32
  }
}

</mosaic_0001>

<llo_original>
// kernel: my_linear.1
$region0: #{my_linear.1}
  #allocation0 [shape = 'u32[]', space=smem, size = 0x4, offset = 0x4, fixed_abs, tag = 'smem constant byte address 0x4 - core index']
  #allocation1 [shape = 'u32[144,128]{1,0:T(1,128)}', space=vmem, size = 0x12000, scoped, tag = 'internal scratch']
  #allocation2 [shape = 'f32[8,128]{1,0:T(8,128)}', space=vmem, size = 0x1000, scoped, tag = 'scratch operand']
  %s0 = inlined_call_operand.vmem [shape: f32[8,128], index: 0, kind: input, shape index: {}]
  %s1 = inlined_call_operand.vmem [shape: f32[128,128], index: 1, kind: input, shape index: {}]
  %s2 = inlined_call_operand.vmem [shape: f32[1,128], index: 2, kind: input, shape index: {}]
  %s3 = inlined_call_operand.hbm [shape: f32[8,128], index: 3, kind: output, shape index: {}]
  %s4 = sld [smem:[#allocation0]]
  $region30: #{my_linear.1} parent=0
    _
  %s6 = ssub.s32 1, %s4
  %s7 = scalar_select 0, %s6, %s4
  $region1: #{my_linear.1} parent=0
    #allocation3 [shape = 'u8[4096]{0}', space=vmem, size = 0x1000, scoped, tag = 'output window, operand 0, single buffered']
    #allocation4 [shape = 's32[1]{0}', space=sflag, size = 0x4, scoped, tag = 'scoped memory for my_linear.1']
    %8 = vsyncpa [#allocation4], 0
    // Predicated region
    $region2: #{my_linear.1} parent=1 // pred_check
      _
    $region3: #{my_linear.1} parent=1 // pred_check_branch
      %10 = sbr.rel (0) target = $region5
    $region4: #{my_linear.1} parent=1 // pred_region
      _
    $region5: #{my_linear.1} parent=1 // pred_fallthru
      _
    // Predicated region
    $region6: #{my_linear.1} parent=1 // pred_check
      _
    $region7: #{my_linear.1} parent=1 // pred_check_branch
      %12 = sbr.rel (0) target = $region9
    $region8: #{my_linear.1} parent=1 // pred_region
      _
    $region9: #{my_linear.1} parent=1 // pred_fallthru
      _
    // Predicated region
    $region10: #{my_linear.1} parent=1 // pred_check
      _
    $region11: #{my_linear.1} parent=1 // pred_check_branch
      %14 = sbr.rel (0) target = $region13
    $region12: #{my_linear.1} parent=1 // pred_region
      _
    $region13: #{my_linear.1} parent=1 // pred_fallthru
      _
    %p15 = scmp.eq.s32.totalorder 0, 0
    // Predicated region
    $region14: #{my_linear.1} parent=1 // pred_check
      %p16 = pneg %p15
    $region15: #{my_linear.1} parent=1 // pred_check_branch
      %18 = sbr.rel (%p16) target = $region17
    $region16: #{my_linear.1} parent=1 // pred_region
      %19 = vst [vmem:[#allocation2] sm:$0xff] 0.0
    $region17: #{my_linear.1} parent=1 // pred_fallthru
      _
    %v20 = vld [vmem:[#allocation2] sm:$0xff]
    %v21 = vld [vmem:[%s0] sm:$0xff]
    %v22 = vld [vmem:[%s1] sm:$0xff]
    %v23 = vld [vmem:[%s1 + $0x8] sm:$0xff]
    %v24 = vld [vmem:[%s1 + $0x10] sm:$0xff]
    %v25 = vld [vmem:[%s1 + $0x18] sm:$0xff]
    %v26 = vld [vmem:[%s1 + $0x20] sm:$0xff]
    %v27 = vld [vmem:[%s1 + $0x28] sm:$0xff]
    %v28 = vld [vmem:[%s1 + $0x30] sm:$0xff]
    %v29 = vld [vmem:[%s1 + $0x38] sm:$0xff]
    %v30 = vld [vmem:[%s1 + $0x40] sm:$0xff]
    %v31 = vld [vmem:[%s1 + $0x48] sm:$0xff]
    %v32 = vld [vmem:[%s1 + $0x50] sm:$0xff]
    %v33 = vld [vmem:[%s1 + $0x58] sm:$0xff]
    %v34 = vld [vmem:[%s1 + $0x60] sm:$0xff]
    %v35 = vld [vmem:[%s1 + $0x68] sm:$0xff]
    %v36 = vld [vmem:[%s1 + $0x70] sm:$0xff]
    %v37 = vld [vmem:[%s1 + $0x78] sm:$0xff]
    %38 = vmatprep.subr.mxu0 0.0
    %39 = vmatpush1.msra.mxu0 %v22
    %40 = vmatprep.subr.mxu0 0.0
    %41 = vmatpush1.msra.mxu0 %v23
    %42 = vmatprep.subr.mxu0 0.0
    %43 = vmatpush1.msra.mxu0 %v24
    %44 = vmatprep.subr.mxu0 0.0
    %45 = vmatpush1.msra.mxu0 %v25
    %46 = vmatprep.subr.mxu0 0.0
    %47 = vmatpush1.msra.mxu0 %v26
    %48 = vmatprep.subr.mxu0 0.0
    %49 = vmatpush1.msra.mxu0 %v27
    %50 = vmatprep.subr.mxu0 0.0
    %51 = vmatpush1.msra.mxu0 %v28
    %52 = vmatprep.subr.mxu0 0.0
    %53 = vmatpush1.msra.mxu0 %v29
    %54 = vmatprep.subr.mxu0 0.0
    %55 = vmatpush1.msra.mxu0 %v30
    %56 = vmatprep.subr.mxu0 0.0
    %57 = vmatpush1.msra.mxu0 %v31
    %58 = vmatprep.subr.mxu0 0.0
    %59 = vmatpush1.msra.mxu0 %v32
    %60 = vmatprep.subr.mxu0 0.0
    %61 = vmatpush1.msra.mxu0 %v33
    %62 = vmatprep.subr.mxu0 0.0
    %63 = vmatpush1.msra.mxu0 %v34
    %64 = vmatprep.subr.mxu0 0.0
    %65 = vmatpush1.msra.mxu0 %v35
    %66 = vmatprep.subr.mxu0 0.0
    %67 = vmatpush1.msra.mxu0 %v36
    %68 = vmatprep.subr.mxu0 0.0
    %69 = vmatpush1.msra.mxu0 %v37
    %70 = vmatprep.subr.mxu0 0.0
    %71 = vmatpush1.msra.mxu0 0.0
    %72 = vmatprep.subr.mxu0 0.0
    %73 = vmatpush1.msra.mxu0 0.0
    %74 = vmatprep.subr.mxu0 0.0
    %75 = vmatpush1.msra.mxu0 0.0
    %76 = vmatprep.subr.mxu0 0.0
    %77 = vmatpush1.msra.mxu0 0.0
    %78 = vmatprep.subr.mxu0 0.0
    %79 = vmatpush1.msra.mxu0 0.0
    %80 = vmatprep.subr.mxu0 0.0
    %81 = vmatpush1.msra.mxu0 0.0
    %82 = vmatprep.subr.mxu0 0.0
    %83 = vmatpush1.msra.mxu0 0.0
    %84 = vmatprep.subr.mxu0 0.0
    %85 = vmatpush1.msra.mxu0 0.0
    %86 = vmatprep.subr.mxu0 0.0
    %87 = vmatpush1.msra.mxu0 0.0
    %88 = vmatprep.subr.mxu0 0.0
    %89 = vmatpush1.msra.mxu0 0.0
    %90 = vmatprep.subr.mxu0 0.0
    %91 = vmatpush1.msra.mxu0 0.0
    %92 = vmatprep.subr.mxu0 0.0
    %93 = vmatpush1.msra.mxu0 0.0
    %94 = vmatprep.subr.mxu0 0.0
    %95 = vmatpush1.msra.mxu0 0.0
    %96 = vmatprep.subr.mxu0 0.0
    %97 = vmatpush1.msra.mxu0 0.0
    %98 = vmatprep.subr.mxu0 0.0
    %99 = vmatpush1.msra.mxu0 0.0
    %100 = vmatprep.subr.mxu0 0.0
    %101 = vmatpush1.msra.mxu0 0.0
    %102 = vmatprep.mubr.f32.mxu0 0.0
    %103 = vmatmul.mubr.f32.gmra.mrb[0].mxu0 %v21
    %v104 = vpop.f32.mrb[0].mxu0
    %v105 = vadd.f32 0.0, %v104
    %v106 = vpop.f32.mrb[0].mxu0
    %107 = vdwg.mxu0
    %v108 = vadd.f32 %v20, %v105
    %109 = vst [vmem:[#allocation2] sm:$0xff] %v108
    // Predicated region
    $region18: #{my_linear.1} parent=1 // pred_check
      %p110 = pneg %p15
    $region19: #{my_linear.1} parent=1 // pred_check_branch
      %112 = sbr.rel (%p110) target = $region21
    $region20: #{my_linear.1} parent=1 // pred_region
      %v113 = vld [vmem:[#allocation2] sm:$0xff]
      %v114 = vld [vmem:[%s2] sm:$0x1]
      %v116 = vlaneseq
      %v117 = vshrl.u32 %v116, 7
      %v118 = vsub.s32 0, %v117
      %v119 = vrot.slane %v114, %v118
      %v121 = vadd.f32 %v113, %v119
      %122 = vst [vmem:[#allocation3] sm:$0xff] %v121
    $region21: #{my_linear.1} parent=1 // pred_fallthru
      _
    // Predicated region
    $region22: #{my_linear.1} parent=1 // pred_check
      _
    $region23: #{my_linear.1} parent=1 // pred_check_branch
      %124 = sbr.rel (0) target = $region25
    $region24: #{my_linear.1} parent=1 // pred_region
      %s126 = ssub.s32 128, 128
      %127 = vsyncadd [#allocation4], %s126
      %s129 = sshll.u32 [#allocation3], 4
      %s130 = int_to_ptr.vmem [resolvable:$true] %s129
      %132 = dma.vmem_to_hbm [thread:$0]  %s130, 128, %s3, [#allocation4]
    $region25: #{my_linear.1} parent=1 // pred_fallthru
      _
    // Predicated region
    $region26: #{my_linear.1} parent=1 // pred_check
      _
    $region27: #{my_linear.1} parent=1 // pred_check_branch
      %134 = sbr.rel (0) target = $region29
    $region28: #{my_linear.1} parent=1 // pred_region
      %135 = dma.done [#allocation4], 128
    $region29: #{my_linear.1} parent=1 // pred_fallthru
      _
    %136 = vsyncpa [#allocation4], 1

</llo_original>
